<compile_context>
chip_gen: v6e
topology: v6e:2x2x1
jax: 0.10.0
libtpu: 0.0.40
codegen_flags: <defaults>
</compile_context>

<pallas_src>
import functools

import jax
import jax.numpy as jnp
from jax.experimental import pallas as pl
from jax.experimental.pallas import tpu as pltpu

LANE = 128      # lane width: pad feature dims to this
SUBLANE = 8     # sublane width: batch tiles / slab segments aligned to this
MAX_TB = 4096   # batch tile cap (double-buffered x tile @4096 is only ~256 KiB)


def _round_up(n, m):
    return ((n + m - 1) // m) * m


def _num_tensorcores():
    """TensorCores per chip: 2 on v7x, 1 on v5e/v6e (best effort, default 1)."""
    try:
        kind = jax.devices()[0].device_kind.lower()
    except Exception:
        return 1
    return 2 if ("v7" in kind or kind.startswith("tpu7")) else 1


def _dqn_kernel(x_ref, p_ref, o_ref, *, meta):
    # x_ref: [TB, n_obs]    p_ref: [rows, LP] packed param slab    o_ref: [TB, n_actions]
    n_obs = meta["n_obs"]
    hp = meta["hp"]
    ap = meta["ap"]
    na = meta["n_actions"]

    x = x_ref[...]

    # Static (zero-cost) slices of the resident slab.
    w1 = p_ref[meta["off_w1"]:meta["off_w1"] + n_obs, :hp]
    b1 = p_ref[meta["off_b1"]:meta["off_b1"] + 1, :hp]
    w2 = p_ref[meta["off_w2"]:meta["off_w2"] + hp, :hp]
    b2 = p_ref[meta["off_b2"]:meta["off_b2"] + 1, :hp]
    w3 = p_ref[meta["off_w3"]:meta["off_w3"] + hp, :ap]
    b3 = p_ref[meta["off_b3"]:meta["off_b3"] + 1, :ap]

    h1 = jnp.dot(x, w1, preferred_element_type=jnp.float32) + b1
    h1 = jnp.maximum(h1, 0.0)                     # ReLU(fc1)

    # dropout == identity (eval mode)

    h2 = jnp.dot(h1, w2, preferred_element_type=jnp.float32) + b2
    h2 = jnp.maximum(h2, 0.0)                     # ReLU(fc2)

    q = jnp.dot(h2, w3, preferred_element_type=jnp.float32) + b3   # [TB, AP]
    # Store only the real action lanes: narrow HBM writeback, no padded lanes.
    o_ref[...] = q[:, :na].astype(o_ref.dtype)


def pack_params(w1, b1, w2, b2, w3, b3):
    """Pack all weights/biases into one zero-padded [rows, 128] f32 slab.

    Segments are 8-row aligned; hidden/action feature dims are 128-lane padded.
    Done once, outside jit.
    """
    n_obs, H = w1.shape
    A = w3.shape[1]
    HP = _round_up(H, LANE)
    AP = _round_up(A, LANE)
    LP = max(HP, AP)

    off_w1 = 0
    off_b1 = _round_up(n_obs, SUBLANE)
    off_w2 = off_b1 + SUBLANE
    off_b2 = off_w2 + HP
    off_w3 = off_b2 + SUBLANE
    off_b3 = off_w3 + HP
    rows = off_b3 + SUBLANE

    slab = jnp.zeros((rows, LP), jnp.float32)
    slab = slab.at[off_w1:off_w1 + n_obs, :H].set(w1)
    slab = slab.at[off_b1, :H].set(b1)
    slab = slab.at[off_w2:off_w2 + H, :H].set(w2)
    slab = slab.at[off_b2, :H].set(b2)
    slab = slab.at[off_w3:off_w3 + H, :A].set(w3)
    slab = slab.at[off_b3, :A].set(b3)

    meta = dict(n_obs=n_obs, hidden=H, n_actions=A, hp=HP, ap=AP,
                off_w1=off_w1, off_b1=off_b1, off_w2=off_w2,
                off_b2=off_b2, off_w3=off_w3, off_b3=off_b3)
    return slab, meta


def make_dqn_forward(meta, num_cores=None):
    """Build a jitted forward(x, slab) -> [B, n_actions] for this param layout."""
    if num_cores is None:
        num_cores = _num_tensorcores()
    n_obs = meta["n_obs"]
    n_actions = meta["n_actions"]
    kernel = functools.partial(_dqn_kernel, meta=meta)

    @jax.jit
    def forward(x, slab):
        B = x.shape[0]
        # Fewest grid steps possible (overhead-bound kernel), but keep >=2 tiles
        # on v7x so both TensorCores get a share of the batch.
        splits = num_cores if B >= num_cores * SUBLANE else 1
        grid = max(splits, pl.cdiv(B, MAX_TB))
        TB = _round_up(pl.cdiv(B, grid), SUBLANE)
        Bp = grid * TB
        if Bp != B:
            x = jnp.pad(x, ((0, Bp - B), (0, 0)))

        out = pl.pallas_call(
            kernel,
            out_shape=jax.ShapeDtypeStruct((Bp, n_actions), jnp.float32),
            grid=(grid,),
            in_specs=[
                pl.BlockSpec((TB, n_obs), lambda i: (i, 0)),   # x: tiled over batch
                pl.BlockSpec(slab.shape, lambda i: (0, 0)),    # params: VMEM-resident
            ],
            out_specs=pl.BlockSpec((TB, n_actions), lambda i: (i, 0)),
            compiler_params=pltpu.CompilerParams(
                dimension_semantics=("parallel",),             # shard batch over TCs (v7x)
            ),
        )(x, slab)

        return out[:B] if Bp != B else out

    return forward


def init_params(key, n_obs, hidden, n_actions):
    """Deterministic params, mimicking PyTorch Linear init U(-1/sqrt(fan_in), +)."""
    ks = jax.random.split(key, 6)

    def linear(kw, kb, fan_in, fan_out):
        bound = 1.0 / jnp.sqrt(jnp.float32(fan_in))
        w = jax.random.uniform(kw, (fan_in, fan_out), jnp.float32, -bound, bound)
        b = jax.random.uniform(kb, (fan_out,), jnp.float32, -bound, bound)
        return w, b

    w1, b1 = linear(ks[0], ks[1], n_obs, hidden)
    w2, b2 = linear(ks[2], ks[3], hidden, hidden)
    w3, b3 = linear(ks[4], ks[5], hidden, n_actions)
    return w1, b1, w2, b2, w3, b3


def reference_forward(x, w1, b1, w2, b2, w3, b3):
    mm = lambda a, b: jnp.dot(a, b, precision=jax.lax.Precision.HIGHEST)
    h1 = jnp.maximum(mm(x, w1) + b1, 0.0)
    h2 = jnp.maximum(mm(h1, w2) + b2, 0.0)
    return mm(h2, w3) + b3


if __name__ == "__main__":
    # CartPole-ish sizes: 4 observations, 2 actions, hidden=32.
    n_obs, hidden, n_actions = 4, 32, 2
    key = jax.random.PRNGKey(0)
    kx, kp = jax.random.split(key)

    params = init_params(kp, n_obs, hidden, n_actions)
    slab, meta = pack_params(*params)
    dqn_forward = make_dqn_forward(meta)

    # Small batch (single tile, padded to 8 rows) and a larger non-multiple
    # batch that exercises the batch grid / megacore split and row padding.
    for batch in (2, 1000):
        x = jax.random.normal(jax.random.fold_in(kx, batch), (batch, n_obs), jnp.float32)
        out = jax.block_until_ready(dqn_forward(x, slab))
        ref = reference_forward(x, *params)
        assert out.shape == (batch, n_actions)
        assert jnp.allclose(out, ref, atol=1e-4, rtol=1e-4), f"mismatch at batch={batch}"

    print("KERNEL_OK")
</pallas_src>

<mosaic_0001>
module attributes {stable_mosaic.version = 11 : i64} {
  func.func @_dqn_kernel(%arg0: i32, %arg1: memref<8x4xf32, #tpu.memory_space<vmem>>, %arg2: memref<288x128xf32, #tpu.memory_space<vmem>>, %arg3: memref<8x2xf32, #tpu.memory_space<vmem>>) attributes {dimension_semantics = [#tpu.dimension_semantics<parallel>], iteration_bounds = array<i64: 1>, scalar_prefetch = 0 : i64, scratch_operands = 0 : i64, tpu.core_type = #tpu.core_type<tc>, window_params = [{transform_indices = @transform_0, window_bounds = array<i64: 8, 4>}, {pipeline_mode = #tpu.pipeline_mode<synchronous>, transform_indices = @transform_1, window_bounds = array<i64: 288, 128>}, {transform_indices = @transform_2, window_bounds = array<i64: 8, 2>}]} {
    %c0 = arith.constant 0 : index
    %c0_0 = arith.constant 0 : index
    %0 = vector.load %arg1[%c0, %c0_0] : memref<8x4xf32, #tpu.memory_space<vmem>>, vector<8x4xf32>
    %c0_1 = arith.constant 0 : index
    %c0_2 = arith.constant 0 : index
    %1 = vector.load %arg2[%c0_1, %c0_2] : memref<288x128xf32, #tpu.memory_space<vmem>>, vector<4x128xf32>
    %c8 = arith.constant 8 : index
    %c0_3 = arith.constant 0 : index
    %2 = vector.load %arg2[%c8, %c0_3] : memref<288x128xf32, #tpu.memory_space<vmem>>, vector<1x128xf32>
    %c16 = arith.constant 16 : index
    %c0_4 = arith.constant 0 : index
    %3 = vector.load %arg2[%c16, %c0_4] : memref<288x128xf32, #tpu.memory_space<vmem>>, vector<128x128xf32>
    %c144 = arith.constant 144 : index
    %c0_5 = arith.constant 0 : index
    %4 = vector.load %arg2[%c144, %c0_5] : memref<288x128xf32, #tpu.memory_space<vmem>>, vector<1x128xf32>
    %c152 = arith.constant 152 : index
    %c0_6 = arith.constant 0 : index
    %5 = vector.load %arg2[%c152, %c0_6] : memref<288x128xf32, #tpu.memory_space<vmem>>, vector<128x128xf32>
    %c280 = arith.constant 280 : index
    %c0_7 = arith.constant 0 : index
    %6 = vector.load %arg2[%c280, %c0_7] : memref<288x128xf32, #tpu.memory_space<vmem>>, vector<1x128xf32>
    %cst = arith.constant dense<0.000000e+00> : vector<8x128xf32>
    %7 = tpu.matmul %0, %1, %cst {dimension_numbers = #tpu.dot_dimension_numbers<[1], [0], [0], [1], [0, 0, 1, 1], [], []>} : vector<8x4xf32>, vector<4x128xf32>, vector<8x128xf32> -> vector<8x128xf32>
    %8 = vector.broadcast %2 : vector<1x128xf32> to vector<8x128xf32>
    %9 = arith.addf %7, %8 : vector<8x128xf32>
    %cst_8 = arith.constant 0.000000e+00 : f32
    %10 = vector.broadcast %cst_8 : f32 to vector<8x128xf32>
    %11 = arith.maximumf %9, %10 : vector<8x128xf32>
    %cst_9 = arith.constant dense<0.000000e+00> : vector<8x128xf32>
    %12 = tpu.matmul %11, %3, %cst_9 {dimension_numbers = #tpu.dot_dimension_numbers<[1], [0], [0], [1], [0, 0, 1, 1], [], []>} : vector<8x128xf32>, vector<128x128xf32>, vector<8x128xf32> -> vector<8x128xf32>
    %13 = vector.broadcast %4 : vector<1x128xf32> to vector<8x128xf32>
    %14 = arith.addf %12, %13 : vector<8x128xf32>
    %cst_10 = arith.constant 0.000000e+00 : f32
    %15 = vector.broadcast %cst_10 : f32 to vector<8x128xf32>
    %16 = arith.maximumf %14, %15 : vector<8x128xf32>
    %cst_11 = arith.constant dense<0.000000e+00> : vector<8x128xf32>
    %17 = tpu.matmul %16, %5, %cst_11 {dimension_numbers = #tpu.dot_dimension_numbers<[1], [0], [0], [1], [0, 0, 1, 1], [], []>} : vector<8x128xf32>, vector<128x128xf32>, vector<8x128xf32> -> vector<8x128xf32>
    %18 = vector.broadcast %6 : vector<1x128xf32> to vector<8x128xf32>
    %19 = arith.addf %17, %18 : vector<8x128xf32>
    %20 = vector.extract_strided_slice %19 {offsets = [0, 0], sizes = [8, 2], strides = [1, 1]} : vector<8x128xf32> to vector<8x2xf32>
    %c0_12 = arith.constant 0 : index
    %c0_13 = arith.constant 0 : index
    %21 = vector.load %arg3[%c0_12, %c0_13] : memref<8x2xf32, #tpu.memory_space<vmem>>, vector<8x2xf32>
    tpu.vector_store %arg3[%c0_12, %c0_13], %20 {strides = array<i32>} : memref<8x2xf32, #tpu.memory_space<vmem>>, vector<8x2xf32>,
    return
  }
  func.func @transform_0(%arg0: i32) -> (i32, i32) {
    %c0_i32 = arith.constant 0 : i32
    %c0_i32_0 = arith.constant 0 : i32
    return %arg0, %c0_i32 : i32, i32
  }
  func.func @transform_1(%arg0: i32) -> (i32, i32) {
    %c0_i32 = arith.constant 0 : i32
    %c0_i32_0 = arith.constant 0 : i32
    %c0_i32_1 = arith.constant 0 : i32
    return %c0_i32, %c0_i32_0 : i32, i32
  }
  func.func @transform_2(%arg0: i32) -> (i32, i32) {
    %c0_i32 = arith.constant 0 : i32
    %c0_i32_0 = arith.constant 0 : i32
    return %arg0, %c0_i32 : i32, i32
  }
}

</mosaic_0001>

<llo_original>
// kernel: forward.1
$region0: #{forward.1}
  #allocation0 [shape = 'u32[]', space=smem, size = 0x4, offset = 0x4, fixed_abs, tag = 'smem constant byte address 0x4 - core index']
  #allocation1 [shape = 'u32[144,128]{1,0:T(1,128)}', space=vmem, size = 0x12000, scoped, tag = 'internal scratch']
  %s0 = inlined_call_operand.vmem [shape: f32[8,4], index: 0, kind: input, shape index: {}]
  %s1 = inlined_call_operand.hbm [shape: f32[288,128], index: 1, kind: input, shape index: {}]
  %s2 = inlined_call_operand.vmem [shape: f32[8,2], index: 2, kind: output, shape index: {}]
  %s3 = sld [smem:[#allocation0]]
  $region22: #{forward.1} parent=0
    _
  %s5 = ssub.s32 1, %s3
  %s6 = scalar_select 0, %s5, %s3
  $region1: #{forward.1} parent=0
    #allocation2 [shape = 'u8[147456]{0}', space=vmem, size = 0x24000, scoped, tag = 'input window, operand 1, single buffered']
    #allocation3 [shape = 's32[1]{0}', space=sflag, size = 0x4, scoped, tag = 'scoped memory for forward.1']
    %7 = vsyncpa [#allocation3], 0
    // Predicated region
    $region2: #{forward.1} parent=1 // pred_check
      _
    $region3: #{forward.1} parent=1 // pred_check_branch
      %9 = sbr.rel (0) target = $region5
    $region4: #{forward.1} parent=1 // pred_region
      _
    $region5: #{forward.1} parent=1 // pred_fallthru
      _
    // Predicated region
    $region6: #{forward.1} parent=1 // pred_check
      _
    $region7: #{forward.1} parent=1 // pred_check_branch
      %11 = sbr.rel (0) target = $region9
    $region8: #{forward.1} parent=1 // pred_region
      %s13 = ssub.s32 4608, 4608
      %14 = vsyncadd [#allocation3], %s13
      %s15 = sshll.u32 [#allocation2], 4
      %s16 = int_to_ptr.vmem [resolvable:$true] %s15
      %21 = dma.hbm_to_vmem [thread:$0]  %s1, 4608, %s16, [#allocation3], 128, 128, 8
    $region9: #{forward.1} parent=1 // pred_fallthru
      _
    // Predicated region
    $region10: #{forward.1} parent=1 // pred_check
      _
    $region11: #{forward.1} parent=1 // pred_check_branch
      %23 = sbr.rel (0) target = $region13
    $region12: #{forward.1} parent=1 // pred_region
      %24 = dma.done [#allocation3], 4608
    $region13: #{forward.1} parent=1 // pred_fallthru
      _
    %v25 = vld [vmem:[%s0] sm:$0xff]
    %v26 = vld [vmem:[#allocation2] sm:$0xf]
    %v27 = vld [vmem:[#allocation2 + $0x8] sm:$0x1]
    %v28 = vld [vmem:[#allocation2 + $0x10] sm:$0xff]
    %v29 = vld [vmem:[#allocation2 + $0x18] sm:$0xff]
    %v30 = vld [vmem:[#allocation2 + $0x20] sm:$0xff]
    %v31 = vld [vmem:[#allocation2 + $0x28] sm:$0xff]
    %v32 = vld [vmem:[#allocation2 + $0x30] sm:$0xff]
    %v33 = vld [vmem:[#allocation2 + $0x38] sm:$0xff]
    %v34 = vld [vmem:[#allocation2 + $0x40] sm:$0xff]
    %v35 = vld [vmem:[#allocation2 + $0x48] sm:$0xff]
    %v36 = vld [vmem:[#allocation2 + $0x50] sm:$0xff]
    %v37 = vld [vmem:[#allocation2 + $0x58] sm:$0xff]
    %v38 = vld [vmem:[#allocation2 + $0x60] sm:$0xff]
    %v39 = vld [vmem:[#allocation2 + $0x68] sm:$0xff]
    %v40 = vld [vmem:[#allocation2 + $0x70] sm:$0xff]
    %v41 = vld [vmem:[#allocation2 + $0x78] sm:$0xff]
    %v42 = vld [vmem:[#allocation2 + $0x80] sm:$0xff]
    %v43 = vld [vmem:[#allocation2 + $0x88] sm:$0xff]
    %v44 = vld [vmem:[#allocation2 + $0x90] sm:$0x1]
    %v45 = vld [vmem:[#allocation2 + $0x98] sm:$0xff]
    %v46 = vld [vmem:[#allocation2 + $0xa0] sm:$0xff]
    %v47 = vld [vmem:[#allocation2 + $0xa8] sm:$0xff]
    %v48 = vld [vmem:[#allocation2 + $0xb0] sm:$0xff]
    %v49 = vld [vmem:[#allocation2 + $0xb8] sm:$0xff]
    %v50 = vld [vmem:[#allocation2 + $0xc0] sm:$0xff]
    %v51 = vld [vmem:[#allocation2 + $0xc8] sm:$0xff]
    %v52 = vld [vmem:[#allocation2 + $0xd0] sm:$0xff]
    %v53 = vld [vmem:[#allocation2 + $0xd8] sm:$0xff]
    %v54 = vld [vmem:[#allocation2 + $0xe0] sm:$0xff]
    %v55 = vld [vmem:[#allocation2 + $0xe8] sm:$0xff]
    %v56 = vld [vmem:[#allocation2 + $0xf0] sm:$0xff]
    %v57 = vld [vmem:[#allocation2 + $0xf8] sm:$0xff]
    %v58 = vld [vmem:[#allocation2 + $0x100] sm:$0xff]
    %v59 = vld [vmem:[#allocation2 + $0x108] sm:$0xff]
    %v60 = vld [vmem:[#allocation2 + $0x110] sm:$0xff]
    %v61 = vld [vmem:[#allocation2 + $0x118] sm:$0x1]
    %v62 = vlaneseq
    %v63 = vshrl.u32 %v62, 7
    %v64 = vsub.s32 0, %v63
    %v65 = vrot.slane %v27, %v64
    %vm66 = vcmask 31744
    %v68 = vsel %vm66, %v25, 0
    %vm70 = vcmask 1043456
    %v72 = vsel %vm70, %v26, 0
    %74 = vmatprep.subr.mxu0 0.0
    %75 = vmatpush1.msra.mxu0 0.0
    %76 = vmatprep.subr.mxu0 0.0
    %77 = vmatpush1.msra.mxu0 0.0
    %78 = vmatprep.subr.mxu0 0.0
    %79 = vmatpush1.msra.mxu0 0.0
    %80 = vmatprep.subr.mxu0 0.0
    %81 = vmatpush1.msra.mxu0 0.0
    %82 = vmatprep.subr.mxu0 0.0
    %83 = vmatpush1.msra.mxu0 0.0
    %84 = vmatprep.subr.mxu0 0.0
    %85 = vmatpush1.msra.mxu0 0.0
    %86 = vmatprep.subr.mxu0 0.0
    %87 = vmatpush1.msra.mxu0 0.0
    %88 = vmatprep.subr.mxu0 0.0
    %89 = vmatpush1.msra.mxu0 0.0
    %90 = vmatprep.subr.mxu0 0.0
    %91 = vmatpush1.msra.mxu0 0.0
    %92 = vmatprep.subr.mxu0 0.0
    %93 = vmatpush1.msra.mxu0 0.0
    %94 = vmatprep.subr.mxu0 0.0
    %95 = vmatpush1.msra.mxu0 0.0
    %96 = vmatprep.subr.mxu0 0.0
    %97 = vmatpush1.msra.mxu0 0.0
    %98 = vmatprep.subr.mxu0 0.0
    %99 = vmatpush1.msra.mxu0 0.0
    %100 = vmatprep.subr.mxu0 0.0
    %101 = vmatpush1.msra.mxu0 0.0
    %102 = vmatprep.subr.mxu0 0.0
    %103 = vmatpush1.msra.mxu0 0.0
    %104 = vmatprep.subr.mxu0 0.0
    %105 = vmatpush1.msra.mxu0 %v72
    %106 = vmatprep.subr.mxu0 0.0
    %107 = vmatpush2.msra.mxu0 0.0
    %108 = vmatprep.subr.mxu0 0.0
    %109 = vmatpush2.msra.mxu0 0.0
    %110 = vmatprep.subr.mxu0 0.0
    %111 = vmatpush2.msra.mxu0 0.0
    %112 = vmatprep.subr.mxu0 0.0
    %113 = vmatpush2.msra.mxu0 0.0
    %114 = vmatprep.subr.mxu0 0.0
    %115 = vmatpush2.msra.mxu0 0.0
    %116 = vmatprep.subr.mxu0 0.0
    %117 = vmatpush2.msra.mxu0 0.0
    %118 = vmatprep.subr.mxu0 0.0
    %119 = vmatpush2.msra.mxu0 0.0
    %120 = vmatprep.subr.mxu0 0.0
    %121 = vmatpush2.msra.mxu0 0.0
    %122 = vmatprep.subr.mxu0 0.0
    %123 = vmatpush2.msra.mxu0 0.0
    %124 = vmatprep.subr.mxu0 0.0
    %125 = vmatpush2.msra.mxu0 0.0
    %126 = vmatprep.subr.mxu0 0.0
    %127 = vmatpush2.msra.mxu0 0.0
    %128 = vmatprep.subr.mxu0 0.0
    %129 = vmatpush2.msra.mxu0 0.0
    %130 = vmatprep.subr.mxu0 0.0
    %131 = vmatpush2.msra.mxu0 0.0
    %132 = vmatprep.subr.mxu0 0.0
    %133 = vmatpush2.msra.mxu0 0.0
    %134 = vmatprep.subr.mxu0 0.0
    %135 = vmatpush2.msra.mxu0 0.0
    %136 = vmatprep.subr.mxu0 0.0
    %137 = vmatpush2.msra.mxu0 0.0
    %138 = vmatprep.mubr.f32.mxu0 0.0
    %139 = vmatmul.mubr.f32.gmra.mxu0 %v68
    %v140 = vpop.f32.mrf.mxu0
    %v141 = vadd.f32 %v65, %v140
    %v142 = vpop.f32.mrf.mxu0
    %143 = vdwg.mxu0
    %v144 = vmax.f32 %v141, 0.0
    %v145 = vlaneseq
    %v146 = vshrl.u32 %v145, 7
    %v147 = vsub.s32 0, %v146
    %v148 = vrot.slane %v44, %v147
    %149 = vmatprep.subr.mxu0 0.0
    %150 = vmatpush1.msra.mxu0 %v43
    %151 = vmatprep.subr.mxu0 0.0
    %152 = vmatpush1.msra.mxu0 %v42
    %153 = vmatprep.subr.mxu0 0.0
    %154 = vmatpush1.msra.mxu0 %v41
    %155 = vmatprep.subr.mxu0 0.0
    %156 = vmatpush1.msra.mxu0 %v40
    %157 = vmatprep.subr.mxu0 0.0
    %158 = vmatpush1.msra.mxu0 %v39
    %159 = vmatprep.subr.mxu0 0.0
    %160 = vmatpush1.msra.mxu0 %v38
    %161 = vmatprep.subr.mxu0 0.0
    %162 = vmatpush1.msra.mxu0 %v37
    %163 = vmatprep.subr.mxu0 0.0
    %164 = vmatpush1.msra.mxu0 %v36
    %165 = vmatprep.subr.mxu0 0.0
    %166 = vmatpush1.msra.mxu0 %v35
    %167 = vmatprep.subr.mxu0 0.0
    %168 = vmatpush1.msra.mxu0 %v34
    %169 = vmatprep.subr.mxu0 0.0
    %170 = vmatpush1.msra.mxu0 %v33
    %171 = vmatprep.subr.mxu0 0.0
    %172 = vmatpush1.msra.mxu0 %v32
    %173 = vmatprep.subr.mxu0 0.0
    %174 = vmatpush1.msra.mxu0 %v31
    %175 = vmatprep.subr.mxu0 0.0
    %176 = vmatpush1.msra.mxu0 %v30
    %177 = vmatprep.subr.mxu0 0.0
    %178 = vmatpush1.msra.mxu0 %v29
    %179 = vmatprep.subr.mxu0 0.0
    %180 = vmatpush1.msra.mxu0 %v28
    %181 = vmatprep.subr.mxu0 0.0
    %182 = vmatpush2.msra.mxu0 0.0
    %183 = vmatprep.subr.mxu0 0.0
    %184 = vmatpush2.msra.mxu0 0.0
    %185 = vmatprep.subr.mxu0 0.0
    %186 = vmatpush2.msra.mxu0 0.0
    %187 = vmatprep.subr.mxu0 0.0
    %188 = vmatpush2.msra.mxu0 0.0
    %189 = vmatprep.subr.mxu0 0.0
    %190 = vmatpush2.msra.mxu0 0.0
    %191 = vmatprep.subr.mxu0 0.0
    %192 = vmatpush2.msra.mxu0 0.0
    %193 = vmatprep.subr.mxu0 0.0
    %194 = vmatpush2.msra.mxu0 0.0
    %195 = vmatprep.subr.mxu0 0.0
    %196 = vmatpush2.msra.mxu0 0.0
    %197 = vmatprep.subr.mxu0 0.0
    %198 = vmatpush2.msra.mxu0 0.0
    %199 = vmatprep.subr.mxu0 0.0
    %200 = vmatpush2.msra.mxu0 0.0
    %201 = vmatprep.subr.mxu0 0.0
    %202 = vmatpush2.msra.mxu0 0.0
    %203 = vmatprep.subr.mxu0 0.0
    %204 = vmatpush2.msra.mxu0 0.0
    %205 = vmatprep.subr.mxu0 0.0
    %206 = vmatpush2.msra.mxu0 0.0
    %207 = vmatprep.subr.mxu0 0.0
    %208 = vmatpush2.msra.mxu0 0.0
    %209 = vmatprep.subr.mxu0 0.0
    %210 = vmatpush2.msra.mxu0 0.0
    %211 = vmatprep.subr.mxu0 0.0
    %212 = vmatpush2.msra.mxu0 0.0
    %213 = vmatprep.mubr.f32.mxu0 0.0
    %214 = vmatmul.mubr.f32.gmra.mxu0 %v144
    %v215 = vpop.f32.mrf.mxu0
    %v216 = vadd.f32 %v148, %v215
    %v217 = vpop.f32.mrf.mxu0
    %218 = vdwg.mxu0
    %v219 = vmax.f32 %v216, 0.0
    %v220 = vlaneseq
    %v221 = vshrl.u32 %v220, 7
    %v222 = vsub.s32 0, %v221
    %v223 = vrot.slane %v61, %v222
    %224 = vmatprep.subr.mxu0 0.0
    %225 = vmatpush1.msra.mxu0 %v60
    %226 = vmatprep.subr.mxu0 0.0
    %227 = vmatpush1.msra.mxu0 %v59
    %228 = vmatprep.subr.mxu0 0.0
    %229 = vmatpush1.msra.mxu0 %v58
    %230 = vmatprep.subr.mxu0 0.0
    %231 = vmatpush1.msra.mxu0 %v57
    %232 = vmatprep.subr.mxu0 0.0
    %233 = vmatpush1.msra.mxu0 %v56
    %234 = vmatprep.subr.mxu0 0.0
    %235 = vmatpush1.msra.mxu0 %v55
    %236 = vmatprep.subr.mxu0 0.0
    %237 = vmatpush1.msra.mxu0 %v54
    %238 = vmatprep.subr.mxu0 0.0
    %239 = vmatpush1.msra.mxu0 %v53
    %240 = vmatprep.subr.mxu0 0.0
    %241 = vmatpush1.msra.mxu0 %v52
    %242 = vmatprep.subr.mxu0 0.0
    %243 = vmatpush1.msra.mxu0 %v51
    %244 = vmatprep.subr.mxu0 0.0
    %245 = vmatpush1.msra.mxu0 %v50
    %246 = vmatprep.subr.mxu0 0.0
    %247 = vmatpush1.msra.mxu0 %v49
    %248 = vmatprep.subr.mxu0 0.0
    %249 = vmatpush1.msra.mxu0 %v48
    %250 = vmatprep.subr.mxu0 0.0
    %251 = vmatpush1.msra.mxu0 %v47
    %252 = vmatprep.subr.mxu0 0.0
    %253 = vmatpush1.msra.mxu0 %v46
    %254 = vmatprep.subr.mxu0 0.0
    %255 = vmatpush1.msra.mxu0 %v45
    %256 = vmatprep.subr.mxu0 0.0
    %257 = vmatpush2.msra.mxu0 0.0
    %258 = vmatprep.subr.mxu0 0.0
    %259 = vmatpush2.msra.mxu0 0.0
    %260 = vmatprep.subr.mxu0 0.0
    %261 = vmatpush2.msra.mxu0 0.0
    %262 = vmatprep.subr.mxu0 0.0
    %263 = vmatpush2.msra.mxu0 0.0
    %264 = vmatprep.subr.mxu0 0.0
    %265 = vmatpush2.msra.mxu0 0.0
    %266 = vmatprep.subr.mxu0 0.0
    %267 = vmatpush2.msra.mxu0 0.0
    %268 = vmatprep.subr.mxu0 0.0
    %269 = vmatpush2.msra.mxu0 0.0
    %270 = vmatprep.subr.mxu0 0.0
    %271 = vmatpush2.msra.mxu0 0.0
    %272 = vmatprep.subr.mxu0 0.0
    %273 = vmatpush2.msra.mxu0 0.0
    %274 = vmatprep.subr.mxu0 0.0
    %275 = vmatpush2.msra.mxu0 0.0
    %276 = vmatprep.subr.mxu0 0.0
    %277 = vmatpush2.msra.mxu0 0.0
    %278 = vmatprep.subr.mxu0 0.0
    %279 = vmatpush2.msra.mxu0 0.0
    %280 = vmatprep.subr.mxu0 0.0
    %281 = vmatpush2.msra.mxu0 0.0
    %282 = vmatprep.subr.mxu0 0.0
    %283 = vmatpush2.msra.mxu0 0.0
    %284 = vmatprep.subr.mxu0 0.0
    %285 = vmatpush2.msra.mxu0 0.0
    %286 = vmatprep.subr.mxu0 0.0
    %287 = vmatpush2.msra.mxu0 0.0
    %288 = vmatprep.mubr.f32.mxu0 0.0
    %289 = vmatmul.mubr.f32.gmra.mxu0 %v219
    %v290 = vpop.f32.mrf.mxu0
    %v291 = vadd.f32 %v223, %v290
    %v292 = vpop.f32.mrf.mxu0
    %293 = vdwg.mxu0
    %vm294 = vcmask 15360
    %295 = vst.msk [vmem:[%s2] sm:$0xff] %vm294, %v291
    // Predicated region
    $region14: #{forward.1} parent=1 // pred_check
      _
    $region15: #{forward.1} parent=1 // pred_check_branch
      %297 = sbr.rel (0) target = $region17
    $region16: #{forward.1} parent=1 // pred_region
      _
    $region17: #{forward.1} parent=1 // pred_fallthru
      _
    // Predicated region
    $region18: #{forward.1} parent=1 // pred_check
      _
    $region19: #{forward.1} parent=1 // pred_check_branch
      %299 = sbr.rel (0) target = $region21
    $region20: #{forward.1} parent=1 // pred_region
      _
    $region21: #{forward.1} parent=1 // pred_fallthru
      _
    %300 = vsyncpa [#allocation3], 1

</llo_original>
